<compile_context>
chip_gen: v7x
topology: tpu7x:2x2x1
jax: 0.10.0
libtpu: 0.0.40
codegen_flags: <defaults>
</compile_context>

<pallas_src>
import jax
import jax.numpy as jnp
from jax.experimental import pallas as pl
from jax.experimental.pallas import tpu as pltpu


def _round_up(x, m):
    return ((x + m - 1) // m) * m


def _encoder_kernel(xl_ref, xr_ref, fl_ref, fr_ref,
                    w1x_ref, w1f_ref, b1_ref, w2_ref, b2_ref, w3_ref, b3_ref,
                    out_ref):
    """Shared-weight two-branch MLP on lane-packed (rt_p, 128) tiles.

    Inputs are lane-packed: one VMEM row holds `pack` original rows, and the
    weights are block-diagonal (kron(I_pack, W)), so each matmul computes the
    per-row MLP for all packed rows at once.  The two branches are two small
    matmul chains (no concat temporaries); their outputs are summed at the end
    (no final ReLU, matching the reference MLP).
    """
    w1x = w1x_ref[...]
    w1f = w1f_ref[...]
    b1 = b1_ref[...]
    w2 = w2_ref[...]
    b2 = b2_ref[...]
    w3 = w3_ref[...]
    b3 = b3_ref[...]

    def branch(x, f):
        # h1 = [x|f] @ W1 + b1, with the concat folded into two matmuls.
        h = (jnp.dot(x, w1x, preferred_element_type=jnp.float32)
             + jnp.dot(f, w1f, preferred_element_type=jnp.float32)
             + b1)
        h = jnp.maximum(h, 0.0)
        h = jnp.dot(h, w2, preferred_element_type=jnp.float32) + b2
        h = jnp.maximum(h, 0.0)
        return jnp.dot(h, w3, preferred_element_type=jnp.float32) + b3

    out = branch(xl_ref[...], fl_ref[...]) + branch(xr_ref[...], fr_ref[...])
    out_ref[...] = out.astype(out_ref.dtype)


def encoder_forward(X_left, X_right, Feature_left, Feature_right, params,
                    *, row_tile=16384):
    """Pallas implementation of Encoder.forward.

    X_*:       (n, x_dim)      child node positions
    Feature_*: (n, n_feature)  child node features
    returns:   (n, n_feature)  father node feature

    row_tile: original rows per grid step.  Default 16384 rows ~= 15 MiB of
    per-step VMEM working set in the lane-packed layout (double-buffered blocks
    + intermediates), safe on v5e/v6e (128 MiB VMEM) and v7x (64 MiB VMEM).
    """
    w1, b1, w2, b2, w3, b3 = params          # weights already (din, dout)
    n, x_dim = X_left.shape
    f_dim = Feature_left.shape[1]
    n_feature = w3.shape[1]

    # Lane packing factor: `pack` original rows per lane-dense row (8*16 = 128).
    pack = 128 // f_dim if (f_dim <= 128 and 128 % f_dim == 0) else 1

    # ---- wrapper-side weight prep (tiny, done once per trace) ----------------
    w1x = w1[:x_dim]                          # (x_dim, n_feature)  position part
    w1f = w1[x_dim:]                          # (f_dim, n_feature)  feature part
    eye = jnp.eye(pack, dtype=w1.dtype)
    w1x_bd = jnp.kron(eye, w1x)               # (pack*x_dim, pack*n_feature)
    w1f_bd = jnp.kron(eye, w1f)               # (pack*f_dim, pack*n_feature)
    w2_bd = jnp.kron(eye, w2)                 # (pack*nf,    pack*nf)
    w3_bd = jnp.kron(eye, w3)                 # (pack*nf,    pack*nf)
    b1_t = jnp.tile(b1, (1, pack))            # (1, pack*n_feature)
    b2_t = jnp.tile(b2, (1, pack))
    b3_t = jnp.tile(b3, (1, pack))

    # ---- pack rows: (n, c) -> (n/pack, pack*c); contiguous -> free reshape ---
    # Only pad to a multiple of `pack` (<= 7 extra rows), never to row_tile.
    n_pad = _round_up(n, pack)

    def pad_rows(a):
        return a if n_pad == n else jnp.pad(a, ((0, n_pad - n), (0, 0)))

    n_packed = n_pad // pack
    Xl = pad_rows(X_left).reshape(n_packed, pack * x_dim)
    Xr = pad_rows(X_right).reshape(n_packed, pack * x_dim)
    Fl = pad_rows(Feature_left).reshape(n_packed, pack * f_dim)
    Fr = pad_rows(Feature_right).reshape(n_packed, pack * f_dim)

    # ---- packed row tile selection + VMEM budget ------------------------------
    # Per-packed-row f32 working set: 2x double-buffered (Xl,Xr,Fl,Fr) blocks,
    # 2x double-buffered output block, ~6 live intermediates (two branches).
    row_bytes = 4 * (2 * 2 * (pack * x_dim + pack * f_dim)
                     + 2 * pack * n_feature
                     + 6 * pack * n_feature)
    vmem_budget = 40 * 1024 * 1024            # leaves headroom even on v7x (64 MiB)
    rt_cap = max(8, vmem_budget // row_bytes)
    rt_p = min(max(1, int(row_tile) // pack), rt_cap)
    if rt_p >= n_packed:
        rt_p = n_packed                        # single block == full array extent
    else:
        rt_p = max(8, (rt_p // 8) * 8)         # multiple of 8 sublanes

    grid = (pl.cdiv(n_packed, rt_p),)          # ragged last block handled by Pallas

    weight_bytes = 2 * 4 * (w1x_bd.size + w1f_bd.size + w2_bd.size + w3_bd.size
                            + b1_t.size + b2_t.size + b3_t.size)
    vmem_limit = min(48 * 1024 * 1024,
                     max(32 * 1024 * 1024,
                         int(1.25 * (rt_p * row_bytes + weight_bytes))))

    def row_spec(c):
        return pl.BlockSpec((rt_p, c), lambda i: (i, 0))

    def full(a):
        # Weights / biases are tiny: fully resident, fetched once.
        return pl.BlockSpec(a.shape, lambda i: (0, 0))

    out_packed = pl.pallas_call(
        _encoder_kernel,
        out_shape=jax.ShapeDtypeStruct((n_packed, pack * n_feature), jnp.float32),
        grid_spec=pltpu.PrefetchScalarGridSpec(
            num_scalar_prefetch=0,
            grid=grid,
            in_specs=[
                row_spec(pack * x_dim), row_spec(pack * x_dim),
                row_spec(pack * f_dim), row_spec(pack * f_dim),
                full(w1x_bd), full(w1f_bd), full(b1_t),
                full(w2_bd), full(b2_t),
                full(w3_bd), full(b3_t),
            ],
            out_specs=pl.BlockSpec((rt_p, pack * n_feature), lambda i: (i, 0)),
        ),
        compiler_params=pltpu.CompilerParams(
            dimension_semantics=("parallel",),
            vmem_limit_bytes=vmem_limit),
    )(Xl, Xr, Fl, Fr, w1x_bd, w1f_bd, b1_t, w2_bd, b2_t, w3_bd, b3_t)

    # Free reshape back to the module's natural (n, n_feature) layout.
    out = out_packed.reshape(n_pad, n_feature)
    if n_pad != n:
        out = out[:n]   # only when n % pack != 0 (<= 7 padded rows)
    return out


def init_encoder_params(key, in_channel, n_feature):
    """Deterministic init matching the PyTorch module's layer shapes.

    xavier_uniform_(gain=calculate_gain('relu')=sqrt(2)) for weights,
    PyTorch-Linear-default uniform(-1/sqrt(fan_in), 1/sqrt(fan_in)) for biases.
    Weights are returned already transposed to (din, dout).
    """
    dims = (in_channel, n_feature, n_feature, n_feature)
    params = []
    gain = jnp.sqrt(2.0)
    for i in range(1, len(dims)):
        din, dout = dims[i - 1], dims[i]
        key, kw, kb = jax.random.split(key, 3)
        bound_w = gain * jnp.sqrt(6.0 / (din + dout))
        w = jax.random.uniform(kw, (din, dout), jnp.float32, -bound_w, bound_w)
        bound_b = 1.0 / jnp.sqrt(din)
        b = jax.random.uniform(kb, (1, dout), jnp.float32, -bound_b, bound_b)
        params.extend([w, b])
    return tuple(params)


def _reference_forward(X_left, X_right, Feature_left, Feature_right, params):
    w1, b1, w2, b2, w3, b3 = params

    def mlp(x):
        h = jnp.maximum(x @ w1 + b1, 0.0)
        h = jnp.maximum(h @ w2 + b2, 0.0)
        return h @ w3 + b3

    il = jnp.concatenate((X_left, Feature_left), axis=1)
    ir = jnp.concatenate((X_right, Feature_right), axis=1)
    return mlp(il) + mlp(ir)


def _make_inputs(key, n, x_dim, n_feature):
    k1, k2, k3, k4 = jax.random.split(key, 4)
    return (jax.random.normal(k1, (n, x_dim), jnp.float32),
            jax.random.normal(k2, (n, x_dim), jnp.float32),
            jax.random.normal(k3, (n, n_feature), jnp.float32),
            jax.random.normal(k4, (n, n_feature), jnp.float32))


if __name__ == "__main__":
    n_feature = 16   # feature dim d
    x_dim = 3        # position dim (in_channel = n_feature + 3 = 19)
    in_channel = n_feature + x_dim

    key = jax.random.PRNGKey(0)
    key, kp, k1, k2, k3 = jax.random.split(key, 5)
    params = init_encoder_params(kp, in_channel, n_feature)

    # Case 1: tiny (module-default-like), single grid step, n % 8 == 0.
    n1 = 8
    Xl, Xr, Fl, Fr = _make_inputs(k1, n1, x_dim, n_feature)
    out1 = jax.block_until_ready(encoder_forward(Xl, Xr, Fl, Fr, params))
    ref1 = _reference_forward(Xl, Xr, Fl, Fr, params)
    assert out1.shape == (n1, n_feature)
    assert jnp.allclose(out1, ref1, atol=1e-4, rtol=1e-4), "mismatch (n=8)"

    # Case 2: even multi-step pipelined grid (2048 rows, 512-row tiles -> 4 steps).
    n2 = 2048
    Xl2, Xr2, Fl2, Fr2 = _make_inputs(k2, n2, x_dim, n_feature)
    out2 = jax.block_until_ready(
        encoder_forward(Xl2, Xr2, Fl2, Fr2, params, row_tile=512))
    ref2 = _reference_forward(Xl2, Xr2, Fl2, Fr2, params)
    assert out2.shape == (n2, n_feature)
    assert jnp.allclose(out2, ref2, atol=1e-4, rtol=1e-4), "mismatch (n=2048)"

    # Case 3: ragged rows (n % 8 != 0) and a ragged last grid block.
    n3 = 300
    Xl3, Xr3, Fl3, Fr3 = _make_inputs(k3, n3, x_dim, n_feature)
    out3 = jax.block_until_ready(
        encoder_forward(Xl3, Xr3, Fl3, Fr3, params, row_tile=128))
    ref3 = _reference_forward(Xl3, Xr3, Fl3, Fr3, params)
    assert out3.shape == (n3, n_feature)
    assert jnp.allclose(out3, ref3, atol=1e-4, rtol=1e-4), "mismatch (n=300)"

    print("KERNEL_OK")
</pallas_src>

<mosaic_0001>
module attributes {stable_mosaic.version = 11 : i64} {
  func.func @_encoder_kernel(%arg0: i32, %arg1: memref<1x24xf32, #tpu.memory_space<vmem>>, %arg2: memref<1x24xf32, #tpu.memory_space<vmem>>, %arg3: memref<1x128xf32, #tpu.memory_space<vmem>>, %arg4: memref<1x128xf32, #tpu.memory_space<vmem>>, %arg5: memref<24x128xf32, #tpu.memory_space<vmem>>, %arg6: memref<128x128xf32, #tpu.memory_space<vmem>>, %arg7: memref<1x128xf32, #tpu.memory_space<vmem>>, %arg8: memref<128x128xf32, #tpu.memory_space<vmem>>, %arg9: memref<1x128xf32, #tpu.memory_space<vmem>>, %arg10: memref<128x128xf32, #tpu.memory_space<vmem>>, %arg11: memref<1x128xf32, #tpu.memory_space<vmem>>, %arg12: memref<1x128xf32, #tpu.memory_space<vmem>>) attributes {dimension_semantics = [#tpu.dimension_semantics<parallel>], iteration_bounds = array<i64: 1>, scalar_prefetch = 0 : i64, scratch_operands = 0 : i64, tpu.core_type = #tpu.core_type<tc>, window_params = [{transform_indices = @transform_0, window_bounds = array<i64: 1, 24>}, {transform_indices = @transform_1, window_bounds = array<i64: 1, 24>}, {transform_indices = @transform_2, window_bounds = array<i64: 1, 128>}, {transform_indices = @transform_3, window_bounds = array<i64: 1, 128>}, {pipeline_mode = #tpu.pipeline_mode<synchronous>, transform_indices = @transform_4, window_bounds = array<i64: 24, 128>}, {pipeline_mode = #tpu.pipeline_mode<synchronous>, transform_indices = @transform_5, window_bounds = array<i64: 128, 128>}, {pipeline_mode = #tpu.pipeline_mode<synchronous>, transform_indices = @transform_6, window_bounds = array<i64: 1, 128>}, {pipeline_mode = #tpu.pipeline_mode<synchronous>, transform_indices = @transform_7, window_bounds = array<i64: 128, 128>}, {pipeline_mode = #tpu.pipeline_mode<synchronous>, transform_indices = @transform_8, window_bounds = array<i64: 1, 128>}, {pipeline_mode = #tpu.pipeline_mode<synchronous>, transform_indices = @transform_9, window_bounds = array<i64: 128, 128>}, {pipeline_mode = #tpu.pipeline_mode<synchronous>, transform_indices = @transform_10, window_bounds = array<i64: 1, 128>}, {transform_indices = @transform_11, window_bounds = array<i64: 1, 128>}]} {
    %c0 = arith.constant 0 : index
    %c0_0 = arith.constant 0 : index
    %0 = vector.load %arg5[%c0, %c0_0] : memref<24x128xf32, #tpu.memory_space<vmem>>, vector<24x128xf32>
    %c0_1 = arith.constant 0 : index
    %c0_2 = arith.constant 0 : index
    %1 = vector.load %arg6[%c0_1, %c0_2] : memref<128x128xf32, #tpu.memory_space<vmem>>, vector<128x128xf32>
    %c0_3 = arith.constant 0 : index
    %c0_4 = arith.constant 0 : index
    %2 = vector.load %arg7[%c0_3, %c0_4] : memref<1x128xf32, #tpu.memory_space<vmem>>, vector<1x128xf32>
    %c0_5 = arith.constant 0 : index
    %c0_6 = arith.constant 0 : index
    %3 = vector.load %arg8[%c0_5, %c0_6] : memref<128x128xf32, #tpu.memory_space<vmem>>, vector<128x128xf32>
    %c0_7 = arith.constant 0 : index
    %c0_8 = arith.constant 0 : index
    %4 = vector.load %arg9[%c0_7, %c0_8] : memref<1x128xf32, #tpu.memory_space<vmem>>, vector<1x128xf32>
    %c0_9 = arith.constant 0 : index
    %c0_10 = arith.constant 0 : index
    %5 = vector.load %arg10[%c0_9, %c0_10] : memref<128x128xf32, #tpu.memory_space<vmem>>, vector<128x128xf32>
    %c0_11 = arith.constant 0 : index
    %c0_12 = arith.constant 0 : index
    %6 = vector.load %arg11[%c0_11, %c0_12] : memref<1x128xf32, #tpu.memory_space<vmem>>, vector<1x128xf32>
    %c0_13 = arith.constant 0 : index
    %c0_14 = arith.constant 0 : index
    %7 = vector.load %arg1[%c0_13, %c0_14] : memref<1x24xf32, #tpu.memory_space<vmem>>, vector<1x24xf32>
    %c0_15 = arith.constant 0 : index
    %c0_16 = arith.constant 0 : index
    %8 = vector.load %arg3[%c0_15, %c0_16] : memref<1x128xf32, #tpu.memory_space<vmem>>, vector<1x128xf32>
    %cst = arith.constant dense<0.000000e+00> : vector<1x128xf32>
    %9 = tpu.matmul %7, %0, %cst {dimension_numbers = #tpu.dot_dimension_numbers<[1], [0], [0], [1], [0, 0, 1, 1], [], []>} : vector<1x24xf32>, vector<24x128xf32>, vector<1x128xf32> -> vector<1x128xf32>
    %cst_17 = arith.constant dense<0.000000e+00> : vector<1x128xf32>
    %10 = tpu.matmul %8, %1, %cst_17 {dimension_numbers = #tpu.dot_dimension_numbers<[1], [0], [0], [1], [0, 0, 1, 1], [], []>} : vector<1x128xf32>, vector<128x128xf32>, vector<1x128xf32> -> vector<1x128xf32>
    %11 = arith.addf %9, %10 : vector<1x128xf32>
    %12 = arith.addf %11, %2 : vector<1x128xf32>
    %cst_18 = arith.constant 0.000000e+00 : f32
    %13 = vector.broadcast %cst_18 : f32 to vector<1x128xf32>
    %14 = arith.maximumf %12, %13 : vector<1x128xf32>
    %cst_19 = arith.constant dense<0.000000e+00> : vector<1x128xf32>
    %15 = tpu.matmul %14, %3, %cst_19 {dimension_numbers = #tpu.dot_dimension_numbers<[1], [0], [0], [1], [0, 0, 1, 1], [], []>} : vector<1x128xf32>, vector<128x128xf32>, vector<1x128xf32> -> vector<1x128xf32>
    %16 = arith.addf %15, %4 : vector<1x128xf32>
    %cst_20 = arith.constant 0.000000e+00 : f32
    %17 = vector.broadcast %cst_20 : f32 to vector<1x128xf32>
    %18 = arith.maximumf %16, %17 : vector<1x128xf32>
    %cst_21 = arith.constant dense<0.000000e+00> : vector<1x128xf32>
    %19 = tpu.matmul %18, %5, %cst_21 {dimension_numbers = #tpu.dot_dimension_numbers<[1], [0], [0], [1], [0, 0, 1, 1], [], []>} : vector<1x128xf32>, vector<128x128xf32>, vector<1x128xf32> -> vector<1x128xf32>
    %20 = arith.addf %19, %6 : vector<1x128xf32>
    %c0_22 = arith.constant 0 : index
    %c0_23 = arith.constant 0 : index
    %21 = vector.load %arg2[%c0_22, %c0_23] : memref<1x24xf32, #tpu.memory_space<vmem>>, vector<1x24xf32>
    %c0_24 = arith.constant 0 : index
    %c0_25 = arith.constant 0 : index
    %22 = vector.load %arg4[%c0_24, %c0_25] : memref<1x128xf32, #tpu.memory_space<vmem>>, vector<1x128xf32>
    %cst_26 = arith.constant dense<0.000000e+00> : vector<1x128xf32>
    %23 = tpu.matmul %21, %0, %cst_26 {dimension_numbers = #tpu.dot_dimension_numbers<[1], [0], [0], [1], [0, 0, 1, 1], [], []>} : vector<1x24xf32>, vector<24x128xf32>, vector<1x128xf32> -> vector<1x128xf32>
    %cst_27 = arith.constant dense<0.000000e+00> : vector<1x128xf32>
    %24 = tpu.matmul %22, %1, %cst_27 {dimension_numbers = #tpu.dot_dimension_numbers<[1], [0], [0], [1], [0, 0, 1, 1], [], []>} : vector<1x128xf32>, vector<128x128xf32>, vector<1x128xf32> -> vector<1x128xf32>
    %25 = arith.addf %23, %24 : vector<1x128xf32>
    %26 = arith.addf %25, %2 : vector<1x128xf32>
    %cst_28 = arith.constant 0.000000e+00 : f32
    %27 = vector.broadcast %cst_28 : f32 to vector<1x128xf32>
    %28 = arith.maximumf %26, %27 : vector<1x128xf32>
    %cst_29 = arith.constant dense<0.000000e+00> : vector<1x128xf32>
    %29 = tpu.matmul %28, %3, %cst_29 {dimension_numbers = #tpu.dot_dimension_numbers<[1], [0], [0], [1], [0, 0, 1, 1], [], []>} : vector<1x128xf32>, vector<128x128xf32>, vector<1x128xf32> -> vector<1x128xf32>
    %30 = arith.addf %29, %4 : vector<1x128xf32>
    %cst_30 = arith.constant 0.000000e+00 : f32
    %31 = vector.broadcast %cst_30 : f32 to vector<1x128xf32>
    %32 = arith.maximumf %30, %31 : vector<1x128xf32>
    %cst_31 = arith.constant dense<0.000000e+00> : vector<1x128xf32>
    %33 = tpu.matmul %32, %5, %cst_31 {dimension_numbers = #tpu.dot_dimension_numbers<[1], [0], [0], [1], [0, 0, 1, 1], [], []>} : vector<1x128xf32>, vector<128x128xf32>, vector<1x128xf32> -> vector<1x128xf32>
    %34 = arith.addf %33, %6 : vector<1x128xf32>
    %35 = arith.addf %20, %34 : vector<1x128xf32>
    %c0_32 = arith.constant 0 : index
    %c0_33 = arith.constant 0 : index
    %36 = vector.load %arg12[%c0_32, %c0_33] : memref<1x128xf32, #tpu.memory_space<vmem>>, vector<1x128xf32>
    tpu.vector_store %arg12[%c0_32, %c0_33], %35 {strides = array<i32>} : memref<1x128xf32, #tpu.memory_space<vmem>>, vector<1x128xf32>,
    return
  }
  func.func @transform_0(%arg0: i32) -> (i32, i32) {
    %c0_i32 = arith.constant 0 : i32
    %c0_i32_0 = arith.constant 0 : i32
    return %arg0, %c0_i32 : i32, i32
  }
  func.func @transform_1(%arg0: i32) -> (i32, i32) {
    %c0_i32 = arith.constant 0 : i32
    %c0_i32_0 = arith.constant 0 : i32
    return %arg0, %c0_i32 : i32, i32
  }
  func.func @transform_2(%arg0: i32) -> (i32, i32) {
    %c0_i32 = arith.constant 0 : i32
    %c0_i32_0 = arith.constant 0 : i32
    return %arg0, %c0_i32 : i32, i32
  }
  func.func @transform_3(%arg0: i32) -> (i32, i32) {
    %c0_i32 = arith.constant 0 : i32
    %c0_i32_0 = arith.constant 0 : i32
    return %arg0, %c0_i32 : i32, i32
  }
  func.func @transform_4(%arg0: i32) -> (i32, i32) {
    %c0_i32 = arith.constant 0 : i32
    %c0_i32_0 = arith.constant 0 : i32
    %c0_i32_1 = arith.constant 0 : i32
    return %c0_i32, %c0_i32_0 : i32, i32
  }
  func.func @transform_5(%arg0: i32) -> (i32, i32) {
    %c0_i32 = arith.constant 0 : i32
    %c0_i32_0 = arith.constant 0 : i32
    %c0_i32_1 = arith.constant 0 : i32
    return %c0_i32, %c0_i32_0 : i32, i32
  }
  func.func @transform_6(%arg0: i32) -> (i32, i32) {
    %c0_i32 = arith.constant 0 : i32
    %c0_i32_0 = arith.constant 0 : i32
    %c0_i32_1 = arith.constant 0 : i32
    return %c0_i32, %c0_i32_0 : i32, i32
  }
  func.func @transform_7(%arg0: i32) -> (i32, i32) {
    %c0_i32 = arith.constant 0 : i32
    %c0_i32_0 = arith.constant 0 : i32
    %c0_i32_1 = arith.constant 0 : i32
    return %c0_i32, %c0_i32_0 : i32, i32
  }
  func.func @transform_8(%arg0: i32) -> (i32, i32) {
    %c0_i32 = arith.constant 0 : i32
    %c0_i32_0 = arith.constant 0 : i32
    %c0_i32_1 = arith.constant 0 : i32
    return %c0_i32, %c0_i32_0 : i32, i32
  }
  func.func @transform_9(%arg0: i32) -> (i32, i32) {
    %c0_i32 = arith.constant 0 : i32
    %c0_i32_0 = arith.constant 0 : i32
    %c0_i32_1 = arith.constant 0 : i32
    return %c0_i32, %c0_i32_0 : i32, i32
  }
  func.func @transform_10(%arg0: i32) -> (i32, i32) {
    %c0_i32 = arith.constant 0 : i32
    %c0_i32_0 = arith.constant 0 : i32
    %c0_i32_1 = arith.constant 0 : i32
    return %c0_i32, %c0_i32_0 : i32, i32
  }
  func.func @transform_11(%arg0: i32) -> (i32, i32) {
    %c0_i32 = arith.constant 0 : i32
    %c0_i32_0 = arith.constant 0 : i32
    return %arg0, %c0_i32 : i32, i32
  }
}

</mosaic_0001>

<llo_original>
// kernel: tpu_custom_call.1
$region0: #{tpu_custom_call.1}
  #allocation0 [shape = 'u32[]', space=smem, size = 0x4, offset = 0x4, fixed_abs, tag = 'smem constant byte address 0x4 - core index']
  #allocation1 [shape = 'u32[144,128]{1,0:T(1,128)}', space=vmem, size = 0x12000, scoped, tag = 'internal scratch']
  %s0 = inlined_call_operand.hbm [shape: f32[1,24], index: 0, kind: input, shape index: {}]
  %s1 = inlined_call_operand.vmem [shape: f32[1,24], index: 1, kind: input, shape index: {}]
  %s2 = inlined_call_operand.vmem [shape: f32[1,128], index: 2, kind: input, shape index: {}]
  %s3 = inlined_call_operand.vmem [shape: f32[1,128], index: 3, kind: input, shape index: {}]
  %s4 = inlined_call_operand.hbm [shape: f32[24,128], index: 4, kind: input, shape index: {}]
  %s5 = inlined_call_operand.hbm [shape: f32[128,128], index: 5, kind: input, shape index: {}]
  %s6 = inlined_call_operand.vmem [shape: f32[1,128], index: 6, kind: input, shape index: {}]
  %s7 = inlined_call_operand.hbm [shape: f32[128,128], index: 7, kind: input, shape index: {}]
  %s8 = inlined_call_operand.vmem [shape: f32[1,128], index: 8, kind: input, shape index: {}]
  %s9 = inlined_call_operand.hbm [shape: f32[128,128], index: 9, kind: input, shape index: {}]
  %s10 = inlined_call_operand.vmem [shape: f32[1,128], index: 10, kind: input, shape index: {}]
  %s11 = inlined_call_operand.hbm [shape: f32[1,128], index: 11, kind: output, shape index: {}]
  %s12 = sld [smem:[#allocation0]]
  $region74: #{tpu_custom_call.1} parent=0
    _
  %s14 = ssub.s32 1, %s12
  %s15 = scalar_select 0, %s14, %s12
  $region1: #{tpu_custom_call.1} parent=0
    #allocation2 [shape = 'u8[512]{0}', space=vmem, size = 0x400, scoped, tag = 'input window, operand 0, single buffered']
    #allocation3 [shape = 's32[1]{0}', space=sflag, size = 0x4, scoped, tag = 'scoped memory for tpu_custom_call.1']
    #allocation4 [shape = 's32[1]{0}', space=sflag, size = 0x4, scoped, tag = 'scoped memory for tpu_custom_call.1']
    #allocation5 [shape = 'u8[12288]{0}', space=vmem, size = 0x3000, scoped, tag = 'input window, operand 4, single buffered']
    #allocation6 [shape = 's32[1]{0}', space=sflag, size = 0x4, scoped, tag = 'scoped memory for tpu_custom_call.1']
    #allocation7 [shape = 'u8[65536]{0}', space=vmem, size = 0x10000, scoped, tag = 'input window, operand 5, single buffered']
    #allocation8 [shape = 'u8[65536]{0}', space=vmem, size = 0x10000, scoped, tag = 'input window, operand 7, single buffered']
    #allocation9 [shape = 's32[1]{0}', space=sflag, size = 0x4, scoped, tag = 'scoped memory for tpu_custom_call.1']
    #allocation10 [shape = 'u8[65536]{0}', space=vmem, size = 0x10000, scoped, tag = 'input window, operand 9, single buffered']
    #allocation11 [shape = 'u8[512]{0}', space=vmem, size = 0x400, scoped, tag = 'output window, operand 0, single buffered']
    %16 = vsyncpa [#allocation3], 0
    %17 = vsyncpa [#allocation6], 0
    %18 = vsyncpa [#allocation9], 0
    %19 = vsyncpa [#allocation4], 0
    // Predicated region
    $region2: #{tpu_custom_call.1} parent=1 // pred_check
      _
    $region3: #{tpu_custom_call.1} parent=1 // pred_check_branch
      %21 = sbr.rel (0) target = $region5
    $region4: #{tpu_custom_call.1} parent=1 // pred_region
      %s23 = ssub.s32 16, 16
      %24 = vsyncadd [#allocation3], %s23
      %s26 = sshll.u32 [#allocation2], 4
      %s27 = int_to_ptr.vmem [resolvable:$true] %s26
      %29 = dma.hbm_to_vmem [thread:$0]  %s0, 16, %s27, [#allocation3]
    $region5: #{tpu_custom_call.1} parent=1 // pred_fallthru
      _
    // Predicated region
    $region6: #{tpu_custom_call.1} parent=1 // pred_check
      _
    $region7: #{tpu_custom_call.1} parent=1 // pred_check_branch
      %31 = sbr.rel (0) target = $region9
    $region8: #{tpu_custom_call.1} parent=1 // pred_region
      _
    $region9: #{tpu_custom_call.1} parent=1 // pred_fallthru
      _
    // Predicated region
    $region10: #{tpu_custom_call.1} parent=1 // pred_check
      _
    $region11: #{tpu_custom_call.1} parent=1 // pred_check_branch
      %33 = sbr.rel (0) target = $region13
    $region12: #{tpu_custom_call.1} parent=1 // pred_region
      _
    $region13: #{tpu_custom_call.1} parent=1 // pred_fallthru
      _
    // Predicated region
    $region14: #{tpu_custom_call.1} parent=1 // pred_check
      _
    $region15: #{tpu_custom_call.1} parent=1 // pred_check_branch
      %35 = sbr.rel (0) target = $region17
    $region16: #{tpu_custom_call.1} parent=1 // pred_region
      _
    $region17: #{tpu_custom_call.1} parent=1 // pred_fallthru
      _
    // Predicated region
    $region18: #{tpu_custom_call.1} parent=1 // pred_check
      _
    $region19: #{tpu_custom_call.1} parent=1 // pred_check_branch
      %37 = sbr.rel (0) target = $region21
    $region20: #{tpu_custom_call.1} parent=1 // pred_region
      %s39 = ssub.s32 384, 384
      %40 = vsyncadd [#allocation6], %s39
      %s41 = sshll.u32 [#allocation5], 4
      %s42 = int_to_ptr.vmem [resolvable:$true] %s41
      %47 = dma.hbm_to_vmem [thread:$0]  %s4, 384, %s42, [#allocation6], 128, 128, 8
    $region21: #{tpu_custom_call.1} parent=1 // pred_fallthru
      _
    // Predicated region
    $region22: #{tpu_custom_call.1} parent=1 // pred_check
      _
    $region23: #{tpu_custom_call.1} parent=1 // pred_check_branch
      %49 = sbr.rel (0) target = $region25
    $region24: #{tpu_custom_call.1} parent=1 // pred_region
      %s51 = ssub.s32 2048, 2048
      %52 = vsyncadd [#allocation6], %s51
      %s53 = sshll.u32 [#allocation7], 4
      %s54 = int_to_ptr.vmem [resolvable:$true] %s53
      %59 = dma.hbm_to_vmem [thread:$0]  %s5, 2048, %s54, [#allocation6], 128, 128, 8
    $region25: #{tpu_custom_call.1} parent=1 // pred_fallthru
      _
    // Predicated region
    $region26: #{tpu_custom_call.1} parent=1 // pred_check
      _
    $region27: #{tpu_custom_call.1} parent=1 // pred_check_branch
      %61 = sbr.rel (0) target = $region29
    $region28: #{tpu_custom_call.1} parent=1 // pred_region
      _
    $region29: #{tpu_custom_call.1} parent=1 // pred_fallthru
      _
    // Predicated region
    $region30: #{tpu_custom_call.1} parent=1 // pred_check
      _
    $region31: #{tpu_custom_call.1} parent=1 // pred_check_branch
      %63 = sbr.rel (0) target = $region33
    $region32: #{tpu_custom_call.1} parent=1 // pred_region
      %s65 = ssub.s32 2048, 2048
      %66 = vsyncadd [#allocation9], %s65
      %s67 = sshll.u32 [#allocation8], 4
      %s68 = int_to_ptr.vmem [resolvable:$true] %s67
      %73 = dma.hbm_to_vmem [thread:$0]  %s7, 2048, %s68, [#allocation9], 128, 128, 8
    $region33: #{tpu_custom_call.1} parent=1 // pred_fallthru
      _
    // Predicated region
    $region34: #{tpu_custom_call.1} parent=1 // pred_check
      _
    $region35: #{tpu_custom_call.1} parent=1 // pred_check_branch
      %75 = sbr.rel (0) target = $region37
    $region36: #{tpu_custom_call.1} parent=1 // pred_region
      _
    $region37: #{tpu_custom_call.1} parent=1 // pred_fallthru
      _
    // Predicated region
    $region38: #{tpu_custom_call.1} parent=1 // pred_check
      _
    $region39: #{tpu_custom_call.1} parent=1 // pred_check_branch
      %77 = sbr.rel (0) target = $region41
    $region40: #{tpu_custom_call.1} parent=1 // pred_region
      %s79 = ssub.s32 2048, 2048
      %80 = vsyncadd [#allocation9], %s79
      %s81 = sshll.u32 [#allocation10], 4
      %s82 = int_to_ptr.vmem [resolvable:$true] %s81
      %87 = dma.hbm_to_vmem [thread:$0]  %s9, 2048, %s82, [#allocation9], 128, 128, 8
    $region41: #{tpu_custom_call.1} parent=1 // pred_fallthru
      _
    // Predicated region
    $region42: #{tpu_custom_call.1} parent=1 // pred_check
      _
    $region43: #{tpu_custom_call.1} parent=1 // pred_check_branch
      %89 = sbr.rel (0) target = $region45
    $region44: #{tpu_custom_call.1} parent=1 // pred_region
      _
    $region45: #{tpu_custom_call.1} parent=1 // pred_fallthru
      _
    // Predicated region
    $region46: #{tpu_custom_call.1} parent=1 // pred_check
      _
    $region47: #{tpu_custom_call.1} parent=1 // pred_check_branch
      %91 = sbr.rel (0) target = $region49
    $region48: #{tpu_custom_call.1} parent=1 // pred_region
      %92 = dma.done [#allocation3], 16
    $region49: #{tpu_custom_call.1} parent=1 // pred_fallthru
      _
    // Predicated region
    $region50: #{tpu_custom_call.1} parent=1 // pred_check
      _
    $region51: #{tpu_custom_call.1} parent=1 // pred_check_branch
      %94 = sbr.rel (0) target = $region53
    $region52: #{tpu_custom_call.1} parent=1 // pred_region
      %95 = dma.done [#allocation6], 384
    $region53: #{tpu_custom_call.1} parent=1 // pred_fallthru
      _
    // Predicated region
    $region54: #{tpu_custom_call.1} parent=1 // pred_check
      _
    $region55: #{tpu_custom_call.1} parent=1 // pred_check_branch
      %97 = sbr.rel (0) target = $region57
    $region56: #{tpu_custom_call.1} parent=1 // pred_region
      %98 = dma.done [#allocation6], 2048
    $region57: #{tpu_custom_call.1} parent=1 // pred_fallthru
      _
    // Predicated region
    $region58: #{tpu_custom_call.1} parent=1 // pred_check
      _
    $region59: #{tpu_custom_call.1} parent=1 // pred_check_branch
      %100 = sbr.rel (0) target = $region61
    $region60: #{tpu_custom_call.1} parent=1 // pred_region
      %101 = dma.done [#allocation9], 2048
    $region61: #{tpu_custom_call.1} parent=1 // pred_fallthru
      _
    // Predicated region
    $region62: #{tpu_custom_call.1} parent=1 // pred_check
      _
    $region63: #{tpu_custom_call.1} parent=1 // pred_check_branch
      %103 = sbr.rel (0) target = $region65
    $region64: #{tpu_custom_call.1} parent=1 // pred_region
      %104 = dma.done [#allocation9], 2048
    $region65: #{tpu_custom_call.1} parent=1 // pred_fallthru
      _
    %v105 = vld [vmem:[#allocation5] sm:$0xff]
    %v106 = vld [vmem:[#allocation5 + $0x8] sm:$0xff]
    %v107 = vld [vmem:[#allocation5 + $0x10] sm:$0xff]
    %v108 = vld [vmem:[#allocation7] sm:$0xff]
    %v109 = vld [vmem:[#allocation7 + $0x8] sm:$0xff]
    %v110 = vld [vmem:[#allocation7 + $0x10] sm:$0xff]
    %v111 = vld [vmem:[#allocation7 + $0x18] sm:$0xff]
    %v112 = vld [vmem:[#allocation7 + $0x20] sm:$0xff]
    %v113 = vld [vmem:[#allocation7 + $0x28] sm:$0xff]
    %v114 = vld [vmem:[#allocation7 + $0x30] sm:$0xff]
    %v115 = vld [vmem:[#allocation7 + $0x38] sm:$0xff]
    %v116 = vld [vmem:[#allocation7 + $0x40] sm:$0xff]
    %v117 = vld [vmem:[#allocation7 + $0x48] sm:$0xff]
    %v118 = vld [vmem:[#allocation7 + $0x50] sm:$0xff]
    %v119 = vld [vmem:[#allocation7 + $0x58] sm:$0xff]
    %v120 = vld [vmem:[#allocation7 + $0x60] sm:$0xff]
    %v121 = vld [vmem:[#allocation7 + $0x68] sm:$0xff]
    %v122 = vld [vmem:[#allocation7 + $0x70] sm:$0xff]
    %v123 = vld [vmem:[#allocation7 + $0x78] sm:$0xff]
    %v124 = vld [vmem:[%s6] sm:$0x1]
    %v125 = vld [vmem:[#allocation8] sm:$0xff]
    %v126 = vld [vmem:[#allocation8 + $0x8] sm:$0xff]
    %v127 = vld [vmem:[#allocation8 + $0x10] sm:$0xff]
    %v128 = vld [vmem:[#allocation8 + $0x18] sm:$0xff]
    %v129 = vld [vmem:[#allocation8 + $0x20] sm:$0xff]
    %v130 = vld [vmem:[#allocation8 + $0x28] sm:$0xff]
    %v131 = vld [vmem:[#allocation8 + $0x30] sm:$0xff]
    %v132 = vld [vmem:[#allocation8 + $0x38] sm:$0xff]
    %v133 = vld [vmem:[#allocation8 + $0x40] sm:$0xff]
    %v134 = vld [vmem:[#allocation8 + $0x48] sm:$0xff]
    %v135 = vld [vmem:[#allocation8 + $0x50] sm:$0xff]
    %v136 = vld [vmem:[#allocation8 + $0x58] sm:$0xff]
    %v137 = vld [vmem:[#allocation8 + $0x60] sm:$0xff]
    %v138 = vld [vmem:[#allocation8 + $0x68] sm:$0xff]
    %v139 = vld [vmem:[#allocation8 + $0x70] sm:$0xff]
    %v140 = vld [vmem:[#allocation8 + $0x78] sm:$0xff]
    %v141 = vld [vmem:[%s8] sm:$0x1]
    %v142 = vld [vmem:[#allocation10] sm:$0xff]
    %v143 = vld [vmem:[#allocation10 + $0x8] sm:$0xff]
    %v144 = vld [vmem:[#allocation10 + $0x10] sm:$0xff]
    %v145 = vld [vmem:[#allocation10 + $0x18] sm:$0xff]
    %v146 = vld [vmem:[#allocation10 + $0x20] sm:$0xff]
    %v147 = vld [vmem:[#allocation10 + $0x28] sm:$0xff]
    %v148 = vld [vmem:[#allocation10 + $0x30] sm:$0xff]
    %v149 = vld [vmem:[#allocation10 + $0x38] sm:$0xff]
    %v150 = vld [vmem:[#allocation10 + $0x40] sm:$0xff]
    %v151 = vld [vmem:[#allocation10 + $0x48] sm:$0xff]
    %v152 = vld [vmem:[#allocation10 + $0x50] sm:$0xff]
    %v153 = vld [vmem:[#allocation10 + $0x58] sm:$0xff]
    %v154 = vld [vmem:[#allocation10 + $0x60] sm:$0xff]
    %v155 = vld [vmem:[#allocation10 + $0x68] sm:$0xff]
    %v156 = vld [vmem:[#allocation10 + $0x70] sm:$0xff]
    %v157 = vld [vmem:[#allocation10 + $0x78] sm:$0xff]
    %v158 = vld [vmem:[%s10] sm:$0x1]
    %v159 = vld [vmem:[#allocation2] sm:$0x1]
    %v160 = vld [vmem:[%s2] sm:$0x1]
    %161 = vmatprep.subr.mxu0 0.0
    %162 = vmatpush1.msra.mxu0 %v108
    %163 = vmatprep.subr.mxu0 0.0
    %164 = vmatpush1.msra.mxu0 %v109
    %165 = vmatprep.subr.mxu0 0.0
    %166 = vmatpush1.msra.mxu0 %v110
    %167 = vmatprep.subr.mxu0 0.0
    %168 = vmatpush1.msra.mxu0 %v111
    %169 = vmatprep.subr.mxu0 0.0
    %170 = vmatpush1.msra.mxu0 %v112
    %171 = vmatprep.subr.mxu0 0.0
    %172 = vmatpush1.msra.mxu0 %v113
    %173 = vmatprep.subr.mxu0 0.0
    %174 = vmatpush1.msra.mxu0 %v114
    %175 = vmatprep.subr.mxu0 0.0
    %176 = vmatpush1.msra.mxu0 %v115
    %177 = vmatprep.subr.mxu0 0.0
    %178 = vmatpush1.msra.mxu0 %v116
    %179 = vmatprep.subr.mxu0 0.0
    %180 = vmatpush1.msra.mxu0 %v117
    %181 = vmatprep.subr.mxu0 0.0
    %182 = vmatpush1.msra.mxu0 %v118
    %183 = vmatprep.subr.mxu0 0.0
    %184 = vmatpush1.msra.mxu0 %v119
    %185 = vmatprep.subr.mxu0 0.0
    %186 = vmatpush1.msra.mxu0 %v120
    %187 = vmatprep.subr.mxu0 0.0
    %188 = vmatpush1.msra.mxu0 %v121
    %189 = vmatprep.subr.mxu0 0.0
    %190 = vmatpush1.msra.mxu0 %v122
    %191 = vmatprep.subr.mxu0 0.0
    %192 = vmatpush1.msra.mxu0 %v123
    %193 = vmatprep.subr.mxu0 0.0
    %194 = vmatpush1.msra.mxu0 0.0
    %195 = vmatprep.subr.mxu0 0.0
    %196 = vmatpush1.msra.mxu0 0.0
    %197 = vmatprep.subr.mxu0 0.0
    %198 = vmatpush1.msra.mxu0 0.0
    %199 = vmatprep.subr.mxu0 0.0
    %200 = vmatpush1.msra.mxu0 0.0
    %201 = vmatprep.subr.mxu0 0.0
    %202 = vmatpush1.msra.mxu0 0.0
    %203 = vmatprep.subr.mxu0 0.0
    %204 = vmatpush1.msra.mxu0 0.0
    %205 = vmatprep.subr.mxu0 0.0
    %206 = vmatpush1.msra.mxu0 0.0
    %207 = vmatprep.subr.mxu0 0.0
    %208 = vmatpush1.msra.mxu0 0.0
    %209 = vmatprep.subr.mxu0 0.0
    %210 = vmatpush1.msra.mxu0 0.0
    %211 = vmatprep.subr.mxu0 0.0
    %212 = vmatpush1.msra.mxu0 0.0
    %213 = vmatprep.subr.mxu0 0.0
    %214 = vmatpush1.msra.mxu0 0.0
    %215 = vmatprep.subr.mxu0 0.0
    %216 = vmatpush1.msra.mxu0 0.0
    %217 = vmatprep.subr.mxu0 0.0
    %218 = vmatpush1.msra.mxu0 0.0
    %219 = vmatprep.subr.mxu0 0.0
    %220 = vmatpush1.msra.mxu0 0.0
    %221 = vmatprep.subr.mxu0 0.0
    %222 = vmatpush1.msra.mxu0 0.0
    %223 = vmatprep.subr.mxu0 0.0
    %224 = vmatpush1.msra.mxu0 0.0
    %225 = vmatprep.mubr.f32.mxu0 0.0
    %226 = vmatmul.mubr.f32.gmra.mrb[0].mxu0 %v160
    %v227 = vpop.f32.mrb[0].mxu0
    %v228 = vadd.f32 0.0, %v227
    %v229 = vpop.f32.mrb[0].mxu0
    %230 = vdwg.mxu0
    %vm231 = vcmask 195584
    %v233 = vsel %vm231, %v159, 0
    %235 = vmatprep.subr.mxu0 0.0
    %236 = vmatpush1.msra.mxu0 %v105
    %237 = vmatprep.subr.mxu0 0.0
    %238 = vmatpush1.msra.mxu0 %v106
    %239 = vmatprep.subr.mxu0 0.0
    %240 = vmatpush1.msra.mxu0 %v107
    %241 = vmatprep.subr.mxu0 0.0
    %242 = vmatpush1.msra.mxu0 0.0
    %243 = vmatprep.subr.mxu0 0.0
    %244 = vmatpush1.msra.mxu0 0.0
    %245 = vmatprep.subr.mxu0 0.0
    %246 = vmatpush1.msra.mxu0 0.0
    %247 = vmatprep.subr.mxu0 0.0
    %248 = vmatpush1.msra.mxu0 0.0
    %249 = vmatprep.subr.mxu0 0.0
    %250 = vmatpush1.msra.mxu0 0.0
    %251 = vmatprep.subr.mxu0 0.0
    %252 = vmatpush1.msra.mxu0 0.0
    %253 = vmatprep.subr.mxu0 0.0
    %254 = vmatpush1.msra.mxu0 0.0
    %255 = vmatprep.subr.mxu0 0.0
    %256 = vmatpush1.msra.mxu0 0.0
    %257 = vmatprep.subr.mxu0 0.0
    %258 = vmatpush1.msra.mxu0 0.0
    %259 = vmatprep.subr.mxu0 0.0
    %260 = vmatpush1.msra.mxu0 0.0
    %261 = vmatprep.subr.mxu0 0.0
    %262 = vmatpush1.msra.mxu0 0.0
    %263 = vmatprep.subr.mxu0 0.0
    %264 = vmatpush1.msra.mxu0 0.0
    %265 = vmatprep.subr.mxu0 0.0
    %266 = vmatpush1.msra.mxu0 0.0
    %267 = vmatprep.subr.mxu0 0.0
    %268 = vmatpush1.msra.mxu0 0.0
    %269 = vmatprep.subr.mxu0 0.0
    %270 = vmatpush1.msra.mxu0 0.0
    %271 = vmatprep.subr.mxu0 0.0
    %272 = vmatpush1.msra.mxu0 0.0
    %273 = vmatprep.subr.mxu0 0.0
    %274 = vmatpush1.msra.mxu0 0.0
    %275 = vmatprep.subr.mxu0 0.0
    %276 = vmatpush1.msra.mxu0 0.0
    %277 = vmatprep.subr.mxu0 0.0
    %278 = vmatpush1.msra.mxu0 0.0
    %279 = vmatprep.subr.mxu0 0.0
    %280 = vmatpush1.msra.mxu0 0.0
    %281 = vmatprep.subr.mxu0 0.0
    %282 = vmatpush1.msra.mxu0 0.0
    %283 = vmatprep.subr.mxu0 0.0
    %284 = vmatpush1.msra.mxu0 0.0
    %285 = vmatprep.subr.mxu0 0.0
    %286 = vmatpush1.msra.mxu0 0.0
    %287 = vmatprep.subr.mxu0 0.0
    %288 = vmatpush1.msra.mxu0 0.0
    %289 = vmatprep.subr.mxu0 0.0
    %290 = vmatpush1.msra.mxu0 0.0
    %291 = vmatprep.subr.mxu0 0.0
    %292 = vmatpush1.msra.mxu0 0.0
    %293 = vmatprep.subr.mxu0 0.0
    %294 = vmatpush1.msra.mxu0 0.0
    %295 = vmatprep.subr.mxu0 0.0
    %296 = vmatpush1.msra.mxu0 0.0
    %297 = vmatprep.subr.mxu0 0.0
    %298 = vmatpush1.msra.mxu0 0.0
    %299 = vmatprep.mubr.f32.mxu0 0.0
    %300 = vmatmul.mubr.f32.gmra.mrb[0].mxu0 %v233
    %v301 = vpop.f32.mrb[0].mxu0
    %v302 = vadd.f32 %v228, %v301
    %v303 = vpop.f32.mrb[0].mxu0
    %304 = vdwg.mxu0
    %v305 = vadd.f32 %v302, %v124
    %v306 = vmax.f32 %v305, 0.0
    %307 = vmatprep.subr.mxu0 0.0
    %308 = vmatpush1.msra.mxu0 %v125
    %309 = vmatprep.subr.mxu0 0.0
    %310 = vmatpush1.msra.mxu0 %v126
    %311 = vmatprep.subr.mxu0 0.0
    %312 = vmatpush1.msra.mxu0 %v127
    %313 = vmatprep.subr.mxu0 0.0
    %314 = vmatpush1.msra.mxu0 %v128
    %315 = vmatprep.subr.mxu0 0.0
    %316 = vmatpush1.msra.mxu0 %v129
    %317 = vmatprep.subr.mxu0 0.0
    %318 = vmatpush1.msra.mxu0 %v130
    %319 = vmatprep.subr.mxu0 0.0
    %320 = vmatpush1.msra.mxu0 %v131
    %321 = vmatprep.subr.mxu0 0.0
    %322 = vmatpush1.msra.mxu0 %v132
    %323 = vmatprep.subr.mxu0 0.0
    %324 = vmatpush1.msra.mxu0 %v133
    %325 = vmatprep.subr.mxu0 0.0
    %326 = vmatpush1.msra.mxu0 %v134
    %327 = vmatprep.subr.mxu0 0.0
    %328 = vmatpush1.msra.mxu0 %v135
    %329 = vmatprep.subr.mxu0 0.0
    %330 = vmatpush1.msra.mxu0 %v136
    %331 = vmatprep.subr.mxu0 0.0
    %332 = vmatpush1.msra.mxu0 %v137
    %333 = vmatprep.subr.mxu0 0.0
    %334 = vmatpush1.msra.mxu0 %v138
    %335 = vmatprep.subr.mxu0 0.0
    %336 = vmatpush1.msra.mxu0 %v139
    %337 = vmatprep.subr.mxu0 0.0
    %338 = vmatpush1.msra.mxu0 %v140
    %339 = vmatprep.subr.mxu0 0.0
    %340 = vmatpush1.msra.mxu0 0.0
    %341 = vmatprep.subr.mxu0 0.0
    %342 = vmatpush1.msra.mxu0 0.0
    %343 = vmatprep.subr.mxu0 0.0
    %344 = vmatpush1.msra.mxu0 0.0
    %345 = vmatprep.subr.mxu0 0.0
    %346 = vmatpush1.msra.mxu0 0.0
    %347 = vmatprep.subr.mxu0 0.0
    %348 = vmatpush1.msra.mxu0 0.0
    %349 = vmatprep.subr.mxu0 0.0
    %350 = vmatpush1.msra.mxu0 0.0
    %351 = vmatprep.subr.mxu0 0.0
    %352 = vmatpush1.msra.mxu0 0.0
    %353 = vmatprep.subr.mxu0 0.0
    %354 = vmatpush1.msra.mxu0 0.0
    %355 = vmatprep.subr.mxu0 0.0
    %356 = vmatpush1.msra.mxu0 0.0
    %357 = vmatprep.subr.mxu0 0.0
    %358 = vmatpush1.msra.mxu0 0.0
    %359 = vmatprep.subr.mxu0 0.0
    %360 = vmatpush1.msra.mxu0 0.0
    %361 = vmatprep.subr.mxu0 0.0
    %362 = vmatpush1.msra.mxu0 0.0
    %363 = vmatprep.subr.mxu0 0.0
    %364 = vmatpush1.msra.mxu0 0.0
    %365 = vmatprep.subr.mxu0 0.0
    %366 = vmatpush1.msra.mxu0 0.0
    %367 = vmatprep.subr.mxu0 0.0
    %368 = vmatpush1.msra.mxu0 0.0
    %369 = vmatprep.subr.mxu0 0.0
    %370 = vmatpush1.msra.mxu0 0.0
    %371 = vmatprep.mubr.f32.mxu0 0.0
    %372 = vmatmul.mubr.f32.gmra.mrb[0].mxu0 %v306
    %v373 = vpop.f32.mrb[0].mxu0
    %v374 = vadd.f32 %v141, %v373
    %v375 = vpop.f32.mrb[0].mxu0
    %376 = vdwg.mxu0
    %v377 = vmax.f32 %v374, 0.0
    %378 = vmatprep.subr.mxu0 0.0
    %379 = vmatpush1.msra.mxu0 %v142
    %380 = vmatprep.subr.mxu0 0.0
    %381 = vmatpush1.msra.mxu0 %v143
    %382 = vmatprep.subr.mxu0 0.0
    %383 = vmatpush1.msra.mxu0 %v144
    %384 = vmatprep.subr.mxu0 0.0
    %385 = vmatpush1.msra.mxu0 %v145
    %386 = vmatprep.subr.mxu0 0.0
    %387 = vmatpush1.msra.mxu0 %v146
    %388 = vmatprep.subr.mxu0 0.0
    %389 = vmatpush1.msra.mxu0 %v147
    %390 = vmatprep.subr.mxu0 0.0
    %391 = vmatpush1.msra.mxu0 %v148
    %392 = vmatprep.subr.mxu0 0.0
    %393 = vmatpush1.msra.mxu0 %v149
    %394 = vmatprep.subr.mxu0 0.0
    %395 = vmatpush1.msra.mxu0 %v150
    %396 = vmatprep.subr.mxu0 0.0
    %397 = vmatpush1.msra.mxu0 %v151
    %398 = vmatprep.subr.mxu0 0.0
    %399 = vmatpush1.msra.mxu0 %v152
    %400 = vmatprep.subr.mxu0 0.0
    %401 = vmatpush1.msra.mxu0 %v153
    %402 = vmatprep.subr.mxu0 0.0
    %403 = vmatpush1.msra.mxu0 %v154
    %404 = vmatprep.subr.mxu0 0.0
    %405 = vmatpush1.msra.mxu0 %v155
    %406 = vmatprep.subr.mxu0 0.0
    %407 = vmatpush1.msra.mxu0 %v156
    %408 = vmatprep.subr.mxu0 0.0
    %409 = vmatpush1.msra.mxu0 %v157
    %410 = vmatprep.subr.mxu0 0.0
    %411 = vmatpush1.msra.mxu0 0.0
    %412 = vmatprep.subr.mxu0 0.0
    %413 = vmatpush1.msra.mxu0 0.0
    %414 = vmatprep.subr.mxu0 0.0
    %415 = vmatpush1.msra.mxu0 0.0
    %416 = vmatprep.subr.mxu0 0.0
    %417 = vmatpush1.msra.mxu0 0.0
    %418 = vmatprep.subr.mxu0 0.0
    %419 = vmatpush1.msra.mxu0 0.0
    %420 = vmatprep.subr.mxu0 0.0
    %421 = vmatpush1.msra.mxu0 0.0
    %422 = vmatprep.subr.mxu0 0.0
    %423 = vmatpush1.msra.mxu0 0.0
    %424 = vmatprep.subr.mxu0 0.0
    %425 = vmatpush1.msra.mxu0 0.0
    %426 = vmatprep.subr.mxu0 0.0
    %427 = vmatpush1.msra.mxu0 0.0
    %428 = vmatprep.subr.mxu0 0.0
    %429 = vmatpush1.msra.mxu0 0.0
    %430 = vmatprep.subr.mxu0 0.0
    %431 = vmatpush1.msra.mxu0 0.0
    %432 = vmatprep.subr.mxu0 0.0
    %433 = vmatpush1.msra.mxu0 0.0
    %434 = vmatprep.subr.mxu0 0.0
    %435 = vmatpush1.msra.mxu0 0.0
    %436 = vmatprep.subr.mxu0 0.0
    %437 = vmatpush1.msra.mxu0 0.0
    %438 = vmatprep.subr.mxu0 0.0
    %439 = vmatpush1.msra.mxu0 0.0
    %440 = vmatprep.subr.mxu0 0.0
    %441 = vmatpush1.msra.mxu0 0.0
    %442 = vmatprep.mubr.f32.mxu0 0.0
    %443 = vmatmul.mubr.f32.gmra.mrb[0].mxu0 %v377
    %v444 = vpop.f32.mrb[0].mxu0
    %v445 = vadd.f32 %v158, %v444
    %v446 = vpop.f32.mrb[0].mxu0
    %447 = vdwg.mxu0
    %v448 = vld [vmem:[%s1] sm:$0x1]
    %v449 = vld [vmem:[%s3] sm:$0x1]
    %450 = vmatprep.subr.mxu0 0.0
    %451 = vmatpush1.msra.mxu0 %v108
    %452 = vmatprep.subr.mxu0 0.0
    %453 = vmatpush1.msra.mxu0 %v109
    %454 = vmatprep.subr.mxu0 0.0
    %455 = vmatpush1.msra.mxu0 %v110
    %456 = vmatprep.subr.mxu0 0.0
    %457 = vmatpush1.msra.mxu0 %v111
    %458 = vmatprep.subr.mxu0 0.0
    %459 = vmatpush1.msra.mxu0 %v112
    %460 = vmatprep.subr.mxu0 0.0
    %461 = vmatpush1.msra.mxu0 %v113
    %462 = vmatprep.subr.mxu0 0.0
    %463 = vmatpush1.msra.mxu0 %v114
    %464 = vmatprep.subr.mxu0 0.0
    %465 = vmatpush1.msra.mxu0 %v115
    %466 = vmatprep.subr.mxu0 0.0
    %467 = vmatpush1.msra.mxu0 %v116
    %468 = vmatprep.subr.mxu0 0.0
    %469 = vmatpush1.msra.mxu0 %v117
    %470 = vmatprep.subr.mxu0 0.0
    %471 = vmatpush1.msra.mxu0 %v118
    %472 = vmatprep.subr.mxu0 0.0
    %473 = vmatpush1.msra.mxu0 %v119
    %474 = vmatprep.subr.mxu0 0.0
    %475 = vmatpush1.msra.mxu0 %v120
    %476 = vmatprep.subr.mxu0 0.0
    %477 = vmatpush1.msra.mxu0 %v121
    %478 = vmatprep.subr.mxu0 0.0
    %479 = vmatpush1.msra.mxu0 %v122
    %480 = vmatprep.subr.mxu0 0.0
    %481 = vmatpush1.msra.mxu0 %v123
    %482 = vmatprep.subr.mxu0 0.0
    %483 = vmatpush1.msra.mxu0 0.0
    %484 = vmatprep.subr.mxu0 0.0
    %485 = vmatpush1.msra.mxu0 0.0
    %486 = vmatprep.subr.mxu0 0.0
    %487 = vmatpush1.msra.mxu0 0.0
    %488 = vmatprep.subr.mxu0 0.0
    %489 = vmatpush1.msra.mxu0 0.0
    %490 = vmatprep.subr.mxu0 0.0
    %491 = vmatpush1.msra.mxu0 0.0
    %492 = vmatprep.subr.mxu0 0.0
    %493 = vmatpush1.msra.mxu0 0.0
    %494 = vmatprep.subr.mxu0 0.0
    %495 = vmatpush1.msra.mxu0 0.0
    %496 = vmatprep.subr.mxu0 0.0
    %497 = vmatpush1.msra.mxu0 0.0
    %498 = vmatprep.subr.mxu0 0.0
    %499 = vmatpush1.msra.mxu0 0.0
    %500 = vmatprep.subr.mxu0 0.0
    %501 = vmatpush1.msra.mxu0 0.0
    %502 = vmatprep.subr.mxu0 0.0
    %503 = vmatpush1.msra.mxu0 0.0
    %504 = vmatprep.subr.mxu0 0.0
    %505 = vmatpush1.msra.mxu0 0.0
    %506 = vmatprep.subr.mxu0 0.0
    %507 = vmatpush1.msra.mxu0 0.0
    %508 = vmatprep.subr.mxu0 0.0
    %509 = vmatpush1.msra.mxu0 0.0
    %510 = vmatprep.subr.mxu0 0.0
    %511 = vmatpush1.msra.mxu0 0.0
    %512 = vmatprep.subr.mxu0 0.0
    %513 = vmatpush1.msra.mxu0 0.0
    %514 = vmatprep.mubr.f32.mxu0 0.0
    %515 = vmatmul.mubr.f32.gmra.mrb[0].mxu0 %v449
    %v516 = vpop.f32.mrb[0].mxu0
    %v517 = vadd.f32 0.0, %v516
    %v518 = vpop.f32.mrb[0].mxu0
    %519 = vdwg.mxu0
    %v521 = vsel %vm231, %v448, 0
    %523 = vmatprep.subr.mxu0 0.0
    %524 = vmatpush1.msra.mxu0 %v105
    %525 = vmatprep.subr.mxu0 0.0
    %526 = vmatpush1.msra.mxu0 %v106
    %527 = vmatprep.subr.mxu0 0.0
    %528 = vmatpush1.msra.mxu0 %v107
    %529 = vmatprep.subr.mxu0 0.0
    %530 = vmatpush1.msra.mxu0 0.0
    %531 = vmatprep.subr.mxu0 0.0
    %532 = vmatpush1.msra.mxu0 0.0
    %533 = vmatprep.subr.mxu0 0.0
    %534 = vmatpush1.msra.mxu0 0.0
    %535 = vmatprep.subr.mxu0 0.0
    %536 = vmatpush1.msra.mxu0 0.0
    %537 = vmatprep.subr.mxu0 0.0
    %538 = vmatpush1.msra.mxu0 0.0
    %539 = vmatprep.subr.mxu0 0.0
    %540 = vmatpush1.msra.mxu0 0.0
    %541 = vmatprep.subr.mxu0 0.0
    %542 = vmatpush1.msra.mxu0 0.0
    %543 = vmatprep.subr.mxu0 0.0
    %544 = vmatpush1.msra.mxu0 0.0
    %545 = vmatprep.subr.mxu0 0.0
    %546 = vmatpush1.msra.mxu0 0.0
    %547 = vmatprep.subr.mxu0 0.0
    %548 = vmatpush1.msra.mxu0 0.0
    %549 = vmatprep.subr.mxu0 0.0
    %550 = vmatpush1.msra.mxu0 0.0
    %551 = vmatprep.subr.mxu0 0.0
    %552 = vmatpush1.msra.mxu0 0.0
    %553 = vmatprep.subr.mxu0 0.0
    %554 = vmatpush1.msra.mxu0 0.0
    %555 = vmatprep.subr.mxu0 0.0
    %556 = vmatpush1.msra.mxu0 0.0
    %557 = vmatprep.subr.mxu0 0.0
    %558 = vmatpush1.msra.mxu0 0.0
    %559 = vmatprep.subr.mxu0 0.0
    %560 = vmatpush1.msra.mxu0 0.0
    %561 = vmatprep.subr.mxu0 0.0
    %562 = vmatpush1.msra.mxu0 0.0
    %563 = vmatprep.subr.mxu0 0.0
    %564 = vmatpush1.msra.mxu0 0.0
    %565 = vmatprep.subr.mxu0 0.0
    %566 = vmatpush1.msra.mxu0 0.0
    %567 = vmatprep.subr.mxu0 0.0
    %568 = vmatpush1.msra.mxu0 0.0
    %569 = vmatprep.subr.mxu0 0.0
    %570 = vmatpush1.msra.mxu0 0.0
    %571 = vmatprep.subr.mxu0 0.0
    %572 = vmatpush1.msra.mxu0 0.0
    %573 = vmatprep.subr.mxu0 0.0
    %574 = vmatpush1.msra.mxu0 0.0
    %575 = vmatprep.subr.mxu0 0.0
    %576 = vmatpush1.msra.mxu0 0.0
    %577 = vmatprep.subr.mxu0 0.0
    %578 = vmatpush1.msra.mxu0 0.0
    %579 = vmatprep.subr.mxu0 0.0
    %580 = vmatpush1.msra.mxu0 0.0
    %581 = vmatprep.subr.mxu0 0.0
    %582 = vmatpush1.msra.mxu0 0.0
    %583 = vmatprep.subr.mxu0 0.0
    %584 = vmatpush1.msra.mxu0 0.0
    %585 = vmatprep.subr.mxu0 0.0
    %586 = vmatpush1.msra.mxu0 0.0
    %587 = vmatprep.mubr.f32.mxu0 0.0
    %588 = vmatmul.mubr.f32.gmra.mrb[0].mxu0 %v521
    %v589 = vpop.f32.mrb[0].mxu0
    %v590 = vadd.f32 %v517, %v589
    %v591 = vpop.f32.mrb[0].mxu0
    %592 = vdwg.mxu0
    %v593 = vadd.f32 %v590, %v124
    %v594 = vmax.f32 %v593, 0.0
    %595 = vmatprep.subr.mxu0 0.0
    %596 = vmatpush1.msra.mxu0 %v125
    %597 = vmatprep.subr.mxu0 0.0
    %598 = vmatpush1.msra.mxu0 %v126
    %599 = vmatprep.subr.mxu0 0.0
    %600 = vmatpush1.msra.mxu0 %v127
    %601 = vmatprep.subr.mxu0 0.0
    %602 = vmatpush1.msra.mxu0 %v128
    %603 = vmatprep.subr.mxu0 0.0
    %604 = vmatpush1.msra.mxu0 %v129
    %605 = vmatprep.subr.mxu0 0.0
    %606 = vmatpush1.msra.mxu0 %v130
    %607 = vmatprep.subr.mxu0 0.0
    %608 = vmatpush1.msra.mxu0 %v131
    %609 = vmatprep.subr.mxu0 0.0
    %610 = vmatpush1.msra.mxu0 %v132
    %611 = vmatprep.subr.mxu0 0.0
    %612 = vmatpush1.msra.mxu0 %v133
    %613 = vmatprep.subr.mxu0 0.0
    %614 = vmatpush1.msra.mxu0 %v134
    %615 = vmatprep.subr.mxu0 0.0
    %616 = vmatpush1.msra.mxu0 %v135
    %617 = vmatprep.subr.mxu0 0.0
    %618 = vmatpush1.msra.mxu0 %v136
    %619 = vmatprep.subr.mxu0 0.0
    %620 = vmatpush1.msra.mxu0 %v137
    %621 = vmatprep.subr.mxu0 0.0
    %622 = vmatpush1.msra.mxu0 %v138
    %623 = vmatprep.subr.mxu0 0.0
    %624 = vmatpush1.msra.mxu0 %v139
    %625 = vmatprep.subr.mxu0 0.0
    %626 = vmatpush1.msra.mxu0 %v140
    %627 = vmatprep.subr.mxu0 0.0
    %628 = vmatpush1.msra.mxu0 0.0
    %629 = vmatprep.subr.mxu0 0.0
    %630 = vmatpush1.msra.mxu0 0.0
    %631 = vmatprep.subr.mxu0 0.0
    %632 = vmatpush1.msra.mxu0 0.0
    %633 = vmatprep.subr.mxu0 0.0
    %634 = vmatpush1.msra.mxu0 0.0
    %635 = vmatprep.subr.mxu0 0.0
    %636 = vmatpush1.msra.mxu0 0.0
    %637 = vmatprep.subr.mxu0 0.0
    %638 = vmatpush1.msra.mxu0 0.0
    %639 = vmatprep.subr.mxu0 0.0
    %640 = vmatpush1.msra.mxu0 0.0
    %641 = vmatprep.subr.mxu0 0.0
    %642 = vmatpush1.msra.mxu0 0.0
    %643 = vmatprep.subr.mxu0 0.0
    %644 = vmatpush1.msra.mxu0 0.0
    %645 = vmatprep.subr.mxu0 0.0
    %646 = vmatpush1.msra.mxu0 0.0
    %647 = vmatprep.subr.mxu0 0.0
    %648 = vmatpush1.msra.mxu0 0.0
    %649 = vmatprep.subr.mxu0 0.0
    %650 = vmatpush1.msra.mxu0 0.0
    %651 = vmatprep.subr.mxu0 0.0
    %652 = vmatpush1.msra.mxu0 0.0
    %653 = vmatprep.subr.mxu0 0.0
    %654 = vmatpush1.msra.mxu0 0.0
    %655 = vmatprep.subr.mxu0 0.0
    %656 = vmatpush1.msra.mxu0 0.0
    %657 = vmatprep.subr.mxu0 0.0
    %658 = vmatpush1.msra.mxu0 0.0
    %659 = vmatprep.mubr.f32.mxu0 0.0
    %660 = vmatmul.mubr.f32.gmra.mrb[0].mxu0 %v594
    %v661 = vpop.f32.mrb[0].mxu0
    %v662 = vadd.f32 %v141, %v661
    %v663 = vpop.f32.mrb[0].mxu0
    %664 = vdwg.mxu0
    %v665 = vmax.f32 %v662, 0.0
    %666 = vmatprep.subr.mxu0 0.0
    %667 = vmatpush1.msra.mxu0 %v142
    %668 = vmatprep.subr.mxu0 0.0
    %669 = vmatpush1.msra.mxu0 %v143
    %670 = vmatprep.subr.mxu0 0.0
    %671 = vmatpush1.msra.mxu0 %v144
    %672 = vmatprep.subr.mxu0 0.0
    %673 = vmatpush1.msra.mxu0 %v145
    %674 = vmatprep.subr.mxu0 0.0
    %675 = vmatpush1.msra.mxu0 %v146
    %676 = vmatprep.subr.mxu0 0.0
    %677 = vmatpush1.msra.mxu0 %v147
    %678 = vmatprep.subr.mxu0 0.0
    %679 = vmatpush1.msra.mxu0 %v148
    %680 = vmatprep.subr.mxu0 0.0
    %681 = vmatpush1.msra.mxu0 %v149
    %682 = vmatprep.subr.mxu0 0.0
    %683 = vmatpush1.msra.mxu0 %v150
    %684 = vmatprep.subr.mxu0 0.0
    %685 = vmatpush1.msra.mxu0 %v151
    %686 = vmatprep.subr.mxu0 0.0
    %687 = vmatpush1.msra.mxu0 %v152
    %688 = vmatprep.subr.mxu0 0.0
    %689 = vmatpush1.msra.mxu0 %v153
    %690 = vmatprep.subr.mxu0 0.0
    %691 = vmatpush1.msra.mxu0 %v154
    %692 = vmatprep.subr.mxu0 0.0
    %693 = vmatpush1.msra.mxu0 %v155
    %694 = vmatprep.subr.mxu0 0.0
    %695 = vmatpush1.msra.mxu0 %v156
    %696 = vmatprep.subr.mxu0 0.0
    %697 = vmatpush1.msra.mxu0 %v157
    %698 = vmatprep.subr.mxu0 0.0
    %699 = vmatpush1.msra.mxu0 0.0
    %700 = vmatprep.subr.mxu0 0.0
    %701 = vmatpush1.msra.mxu0 0.0
    %702 = vmatprep.subr.mxu0 0.0
    %703 = vmatpush1.msra.mxu0 0.0
    %704 = vmatprep.subr.mxu0 0.0
    %705 = vmatpush1.msra.mxu0 0.0
    %706 = vmatprep.subr.mxu0 0.0
    %707 = vmatpush1.msra.mxu0 0.0
    %708 = vmatprep.subr.mxu0 0.0
    %709 = vmatpush1.msra.mxu0 0.0
    %710 = vmatprep.subr.mxu0 0.0
    %711 = vmatpush1.msra.mxu0 0.0
    %712 = vmatprep.subr.mxu0 0.0
    %713 = vmatpush1.msra.mxu0 0.0
    %714 = vmatprep.subr.mxu0 0.0
    %715 = vmatpush1.msra.mxu0 0.0
    %716 = vmatprep.subr.mxu0 0.0
    %717 = vmatpush1.msra.mxu0 0.0
    %718 = vmatprep.subr.mxu0 0.0
    %719 = vmatpush1.msra.mxu0 0.0
    %720 = vmatprep.subr.mxu0 0.0
    %721 = vmatpush1.msra.mxu0 0.0
    %722 = vmatprep.subr.mxu0 0.0
    %723 = vmatpush1.msra.mxu0 0.0
    %724 = vmatprep.subr.mxu0 0.0
    %725 = vmatpush1.msra.mxu0 0.0
    %726 = vmatprep.subr.mxu0 0.0
    %727 = vmatpush1.msra.mxu0 0.0
    %728 = vmatprep.subr.mxu0 0.0
    %729 = vmatpush1.msra.mxu0 0.0
    %730 = vmatprep.mubr.f32.mxu0 0.0
    %731 = vmatmul.mubr.f32.gmra.mrb[0].mxu0 %v665
    %v732 = vpop.f32.mrb[0].mxu0
    %v733 = vadd.f32 %v158, %v732
    %v734 = vpop.f32.mrb[0].mxu0
    %735 = vdwg.mxu0
    %v736 = vadd.f32 %v445, %v733
    %737 = vst [vmem:[#allocation11] sm:$0x1] %v736
    // Predicated region
    $region66: #{tpu_custom_call.1} parent=1 // pred_check
      _
    $region67: #{tpu_custom_call.1} parent=1 // pred_check_branch
      %739 = sbr.rel (0) target = $region69
    $region68: #{tpu_custom_call.1} parent=1 // pred_region
      %s741 = ssub.s32 16, 16
      %742 = vsyncadd [#allocation4], %s741
      %s744 = sshll.u32 [#allocation11], 4
      %s745 = int_to_ptr.vmem [resolvable:$true] %s744
      %747 = dma.vmem_to_hbm [thread:$0]  %s745, 16, %s11, [#allocation4]
    $region69: #{tpu_custom_call.1} parent=1 // pred_fallthru
      _
    // Predicated region
    $region70: #{tpu_custom_call.1} parent=1 // pred_check
      _
    $region71: #{tpu_custom_call.1} parent=1 // pred_check_branch
      %749 = sbr.rel (0) target = $region73
    $region72: #{tpu_custom_call.1} parent=1 // pred_region
      %750 = dma.done [#allocation4], 16
    $region73: #{tpu_custom_call.1} parent=1 // pred_fallthru
      _
    %751 = vsyncpa [#allocation3], 1
    %752 = vsyncpa [#allocation6], 1
    %753 = vsyncpa [#allocation9], 1
    %754 = vsyncpa [#allocation4], 1

</llo_original>
